<compile_context>
chip_gen: v7x
topology: tpu7x:2x2x1
jax: 0.10.0
libtpu: 0.0.40
codegen_flags: <defaults>
</compile_context>

<pallas_src>
import jax
import jax.numpy as jnp
from jax import lax
from jax.experimental import pallas as pl
from jax.experimental.pallas import tpu as pltpu

_LANE = 128


def _round_up(a: int, b: int) -> int:
    return (a + b - 1) // b * b


def scorenet_kernel(x_ref, w1_ref, b1_ref, w2_ref, b2_ref, o_ref):
    """One row-tile of Linear -> ReLU -> Linear.

    x_ref : (tile, in_feats)            VMEM
    w1_ref: (in_feats, hidden)          VMEM (resident across grid)
    b1_ref: (1, hidden)          f32    VMEM (resident)
    w2_ref: (1, hidden)                 VMEM (resident; second weight as a row)
    b2_ref: (1, 1)               f32    SMEM scalar
    o_ref : (1, 1, tile)                VMEM (lane-dense: rows on lanes)
    """
    # Layer 1 on the MXU with f32 accumulation; bias + ReLU on the VPU in f32.
    h = jnp.dot(x_ref[...], w1_ref[...], preferred_element_type=jnp.float32)
    h = jnp.maximum(h + b1_ref[...], 0.0)

    # Layer 2, transposed / lane-dense: contract (1, hidden) with (tile, hidden)
    # along hidden -> (1, tile). N == tile uses the MXU lane dimension and the
    # result is written with full-width lane-dense stores.
    out_t = lax.dot_general(
        w2_ref[...],
        h.astype(w2_ref.dtype),
        dimension_numbers=(((1,), (1,)), ((), ())),
        preferred_element_type=jnp.float32,
    )
    o_ref[0, :, :] = (out_t + b2_ref[0, 0]).astype(o_ref.dtype)


def scorenet_forward(inputs, w1, b1, w2, b2, *, row_tile=1024, compute_dtype=None):
    """ScoreNet forward: (..., in_feats) -> (..., 1), matching the PyTorch module.

    compute_dtype: optionally cast x / w1 / w2 (e.g. jnp.bfloat16) to halve HBM
    traffic; accumulation, biases and ReLU stay in float32.
    """
    in_feats = inputs.shape[-1]
    hidden = w1.shape[1]
    lead_shape = inputs.shape[:-1]
    out_dtype = inputs.dtype

    x2d = inputs.reshape(-1, in_feats)
    n_rows = x2d.shape[0]

    if compute_dtype is not None:
        x2d = x2d.astype(compute_dtype)
        w1 = w1.astype(compute_dtype)
        w2 = w2.astype(compute_dtype)
    b1 = b1.reshape(1, hidden).astype(jnp.float32)
    b2 = b2.reshape(1, 1).astype(jnp.float32)
    w2_row = w2.reshape(1, hidden)

    # ---- pick a 128-aligned row tile; pad rows up to a multiple of it ------
    row_tile = max(_LANE, _round_up(row_tile, _LANE))
    padded_min = _round_up(n_rows, _LANE)
    tile = min(row_tile, padded_min)
    # Keep >= 2 grid steps when there is enough work so dimension_semantics
    # ("parallel",) can shard across both TensorCores on v7x.
    if padded_min >= 2 * _LANE and _round_up(n_rows, tile) // tile < 2:
        tile = _round_up(padded_min // 2, _LANE)
    n_padded = _round_up(n_rows, tile)
    if n_padded != n_rows:
        x2d = jnp.pad(x2d, ((0, n_padded - n_rows), (0, 0)))
    n_tiles = n_padded // tile

    def _isize(a):
        return jnp.dtype(a.dtype).itemsize

    cost = pl.CostEstimate(
        flops=2 * n_padded * hidden * (in_feats + 1),
        transcendentals=0,
        bytes_accessed=(
            n_padded * in_feats * _isize(x2d)
            + w1.size * _isize(w1)
            + b1.size * 4
            + w2_row.size * _isize(w2_row)
            + 4
            + n_padded * jnp.dtype(out_dtype).itemsize
        ),
    )

    out_t = pl.pallas_call(
        scorenet_kernel,
        out_shape=jax.ShapeDtypeStruct((n_tiles, 1, tile), out_dtype),
        grid_spec=pltpu.PrefetchScalarGridSpec(
            num_scalar_prefetch=0,
            grid=(n_tiles,),
            in_specs=[
                pl.BlockSpec((tile, in_feats), lambda i: (i, 0)),    # x row-tile
                pl.BlockSpec((in_feats, hidden), lambda i: (0, 0)),  # w1 (resident)
                pl.BlockSpec((1, hidden), lambda i: (0, 0)),         # b1 (resident)
                pl.BlockSpec((1, hidden), lambda i: (0, 0)),         # w2 row (resident)
                pl.BlockSpec(memory_space=pltpu.MemorySpace.SMEM),   # b2 scalar
            ],
            out_specs=pl.BlockSpec((1, 1, tile), lambda i: (i, 0, 0)),
        ),
        compiler_params=pltpu.CompilerParams(
            dimension_semantics=("parallel",),
        ),
        cost_estimate=cost,
    )(x2d, w1, b1, w2_row, b2)

    out_flat = out_t.reshape(-1)[:n_rows]
    return out_flat.reshape(*lead_shape, 1)


def init_scorenet_params(key, in_feats, hidden_feats, dtype=jnp.float32):
    """Deterministic synthetic params with nn.Linear-style init.

    PyTorch nn.Linear(in, out) stores weight (out, in); we keep the
    already-transposed (in, out) layout for the kernel's `x @ W` matmuls.
    """
    k1, k2, k3, k4 = jax.random.split(key, 4)
    s1 = 1.0 / jnp.sqrt(in_feats)
    s2 = 1.0 / jnp.sqrt(hidden_feats)
    w1 = jax.random.uniform(k1, (in_feats, hidden_feats), dtype, -s1, s1)
    b1 = jax.random.uniform(k2, (1, hidden_feats), dtype, -s1, s1)
    w2 = jax.random.uniform(k3, (hidden_feats, 1), dtype, -s2, s2)
    b2 = jax.random.uniform(k4, (1, 1), dtype, -s2, s2)
    return w1, b1, w2, b2


if __name__ == "__main__":
    # TODO(synk): nn.Dropout is only present when dropout > 0 (default 0); the
    # inference no-op is not implemented.
    in_feats, hidden_feats = 16, 32

    key = jax.random.PRNGKey(0)
    k_in, k_in2, k_par = jax.random.split(key, 3)
    w1, b1, w2, b2 = init_scorenet_params(k_par, in_feats, hidden_feats)

    # Case 1: small tile-aligned batch (2 x 64 = 128 rows), f32 path.
    x1 = jax.random.normal(k_in, (2, 64, in_feats), jnp.float32)
    out1 = jax.block_until_ready(scorenet_forward(x1, w1, b1, w2, b2))
    ref1 = jnp.maximum(x1 @ w1 + b1[0], 0.0) @ w2 + b2[0]
    assert out1.shape == (2, 64, 1)
    assert jnp.allclose(out1, ref1, atol=1e-5, rtol=1e-5)

    # Case 2: ragged row count (3 x 100 = 300 rows) -> exercises padding and
    # the >=2-grid-step split.
    x2 = jax.random.normal(k_in2, (3, 100, in_feats), jnp.float32)
    out2 = jax.block_until_ready(scorenet_forward(x2, w1, b1, w2, b2))
    ref2 = jnp.maximum(x2 @ w1 + b1[0], 0.0) @ w2 + b2[0]
    assert out2.shape == (3, 100, 1)
    assert jnp.allclose(out2, ref2, atol=1e-5, rtol=1e-5)

    # Case 3: optional bf16 bandwidth path (f32 accumulation kept in-kernel).
    out3 = jax.block_until_ready(
        scorenet_forward(x2, w1, b1, w2, b2, compute_dtype=jnp.bfloat16)
    )
    assert out3.shape == (3, 100, 1)
    assert jnp.allclose(out3, ref2, atol=1e-1, rtol=1e-1)

    print("KERNEL_OK")
</pallas_src>

<mosaic_0001>
module attributes {stable_mosaic.version = 11 : i64} {
  func.func @scorenet_kernel(%arg0: i32, %arg1: memref<128x16xf32, #tpu.memory_space<vmem>>, %arg2: memref<16x32xf32, #tpu.memory_space<vmem>>, %arg3: memref<1x32xf32, #tpu.memory_space<vmem>>, %arg4: memref<1x32xf32, #tpu.memory_space<vmem>>, %arg5: memref<1x1xf32, #tpu.memory_space<smem>>, %arg6: memref<1x1x128xf32, #tpu.memory_space<vmem>>) attributes {dimension_semantics = [#tpu.dimension_semantics<parallel>], iteration_bounds = array<i64: 1>, scalar_prefetch = 0 : i64, scratch_operands = 0 : i64, tpu.core_type = #tpu.core_type<tc>, window_params = [{transform_indices = @transform_0, window_bounds = array<i64: 128, 16>}, {pipeline_mode = #tpu.pipeline_mode<synchronous>, transform_indices = @transform_1, window_bounds = array<i64: 16, 32>}, {pipeline_mode = #tpu.pipeline_mode<synchronous>, transform_indices = @transform_2, window_bounds = array<i64: 1, 32>}, {pipeline_mode = #tpu.pipeline_mode<synchronous>, transform_indices = @transform_3, window_bounds = array<i64: 1, 32>}, {transform_indices = @transform_4, window_bounds = array<i64: 1, 1>}, {transform_indices = @transform_5, window_bounds = array<i64: 1, 1, 128>}]} {
    %c0 = arith.constant 0 : index
    %c0_0 = arith.constant 0 : index
    %0 = vector.load %arg1[%c0, %c0_0] : memref<128x16xf32, #tpu.memory_space<vmem>>, vector<128x16xf32>
    %c0_1 = arith.constant 0 : index
    %c0_2 = arith.constant 0 : index
    %1 = vector.load %arg2[%c0_1, %c0_2] : memref<16x32xf32, #tpu.memory_space<vmem>>, vector<16x32xf32>
    %cst = arith.constant dense<0.000000e+00> : vector<128x32xf32>
    %2 = tpu.matmul %0, %1, %cst {dimension_numbers = #tpu.dot_dimension_numbers<[1], [0], [0], [1], [0, 0, 1, 1], [], []>} : vector<128x16xf32>, vector<16x32xf32>, vector<128x32xf32> -> vector<128x32xf32>
    %c0_3 = arith.constant 0 : index
    %c0_4 = arith.constant 0 : index
    %3 = vector.load %arg3[%c0_3, %c0_4] : memref<1x32xf32, #tpu.memory_space<vmem>>, vector<1x32xf32>
    %4 = vector.broadcast %3 : vector<1x32xf32> to vector<128x32xf32>
    %5 = arith.addf %2, %4 : vector<128x32xf32>
    %cst_5 = arith.constant 0.000000e+00 : f32
    %6 = vector.broadcast %cst_5 : f32 to vector<128x32xf32>
    %7 = arith.maximumf %5, %6 : vector<128x32xf32>
    %c0_6 = arith.constant 0 : index
    %c0_7 = arith.constant 0 : index
    %8 = vector.load %arg4[%c0_6, %c0_7] : memref<1x32xf32, #tpu.memory_space<vmem>>, vector<1x32xf32>
    %cst_8 = arith.constant dense<0.000000e+00> : vector<1x128xf32>
    %9 = tpu.matmul %8, %7, %cst_8 {dimension_numbers = #tpu.dot_dimension_numbers<[1], [1], [0], [0], [0, 0, 1, 0], [], []>} : vector<1x32xf32>, vector<128x32xf32>, vector<1x128xf32> -> vector<1x128xf32>
    %c0_9 = arith.constant 0 : index
    %c0_10 = arith.constant 0 : index
    %10 = memref.load %arg5[%c0_9, %c0_10] : memref<1x1xf32, #tpu.memory_space<smem>>
    %11 = vector.broadcast %10 : f32 to vector<1x128xf32>
    %12 = arith.addf %9, %11 : vector<1x128xf32>
    %c0_11 = arith.constant 0 : index
    %c0_12 = arith.constant 0 : index
    %c0_13 = arith.constant 0 : index
    %13 = vector.load %arg6[%c0_11, %c0_12, %c0_13] : memref<1x1x128xf32, #tpu.memory_space<vmem>>, vector<1x1x128xf32>
    %14 = vector.shape_cast %13 : vector<1x1x128xf32> to vector<1x128xf32>
    %15 = vector.shape_cast %12 : vector<1x128xf32> to vector<1x1x128xf32>
    tpu.vector_store %arg6[%c0_11, %c0_12, %c0_13], %15 {strides = array<i32>} : memref<1x1x128xf32, #tpu.memory_space<vmem>>, vector<1x1x128xf32>,
    return
  }
  func.func @transform_0(%arg0: i32) -> (i32, i32) {
    %c0_i32 = arith.constant 0 : i32
    %c0_i32_0 = arith.constant 0 : i32
    return %arg0, %c0_i32 : i32, i32
  }
  func.func @transform_1(%arg0: i32) -> (i32, i32) {
    %c0_i32 = arith.constant 0 : i32
    %c0_i32_0 = arith.constant 0 : i32
    %c0_i32_1 = arith.constant 0 : i32
    return %c0_i32, %c0_i32_0 : i32, i32
  }
  func.func @transform_2(%arg0: i32) -> (i32, i32) {
    %c0_i32 = arith.constant 0 : i32
    %c0_i32_0 = arith.constant 0 : i32
    %c0_i32_1 = arith.constant 0 : i32
    return %c0_i32, %c0_i32_0 : i32, i32
  }
  func.func @transform_3(%arg0: i32) -> (i32, i32) {
    %c0_i32 = arith.constant 0 : i32
    %c0_i32_0 = arith.constant 0 : i32
    %c0_i32_1 = arith.constant 0 : i32
    return %c0_i32, %c0_i32_0 : i32, i32
  }
  func.func @transform_4(%arg0: i32) -> (i32, i32) {
    %c0_i32 = arith.constant 0 : i32
    %c0_i32_0 = arith.constant 0 : i32
    %c0_i32_1 = arith.constant 0 : i32
    return %c0_i32, %c0_i32_0 : i32, i32
  }
  func.func @transform_5(%arg0: i32) -> (i32, i32, i32) {
    %c0_i32 = arith.constant 0 : i32
    %c0_i32_0 = arith.constant 0 : i32
    %c0_i32_1 = arith.constant 0 : i32
    return %arg0, %c0_i32, %c0_i32_0 : i32, i32, i32
  }
}

</mosaic_0001>

<llo_original>
// kernel: tpu_custom_call.1
$region0: #{tpu_custom_call.1}
  #allocation0 [shape = 'u32[]', space=smem, size = 0x4, offset = 0x4, fixed_abs, tag = 'smem constant byte address 0x4 - core index']
  #allocation1 [shape = 'u32[144,128]{1,0:T(1,128)}', space=vmem, size = 0x12000, scoped, tag = 'internal scratch']
  #allocation2 [shape = 'f32[1,1]{1,0:T(1,128)S(6)}', space=smem, size = 0x200, scoped, tag = 'scoped memory for tpu_custom_call.1']
  %s0 = inlined_call_operand.vmem [shape: f32[128,16], index: 0, kind: input, shape index: {}]
  %s1 = inlined_call_operand.vmem [shape: f32[16,32], index: 1, kind: input, shape index: {}]
  %s2 = inlined_call_operand.vmem [shape: f32[1,32], index: 2, kind: input, shape index: {}]
  %s3 = inlined_call_operand.vmem [shape: f32[1,32], index: 3, kind: input, shape index: {}]
  %s4 = inlined_call_operand.<no memory space> [shape: f32[1,1], index: 4, kind: input, shape index: {}]
  %s5 = inlined_call_operand.hbm [shape: f32[1,1,128], index: 5, kind: output, shape index: {}]
  %s6 = sld [smem:[#allocation0]]
  $region30: #{tpu_custom_call.1} parent=0
    _
  %s8 = ssub.s32 1, %s6
  %s9 = scalar_select 0, %s8, %s6
  %10 = sst [smem:[#allocation2]] %s4
  $region1: #{tpu_custom_call.1} parent=0
    #allocation3 [shape = 'u8[512]{0}', space=vmem, size = 0x400, scoped, tag = 'output window, operand 0, single buffered']
    #allocation4 [shape = 's32[1]{0}', space=sflag, size = 0x4, scoped, tag = 'scoped memory for tpu_custom_call.1']
    %11 = vsyncpa [#allocation4], 0
    // Predicated region
    $region2: #{tpu_custom_call.1} parent=1 // pred_check
      _
    $region3: #{tpu_custom_call.1} parent=1 // pred_check_branch
      %13 = sbr.rel (0) target = $region5
    $region4: #{tpu_custom_call.1} parent=1 // pred_region
      _
    $region5: #{tpu_custom_call.1} parent=1 // pred_fallthru
      _
    // Predicated region
    $region6: #{tpu_custom_call.1} parent=1 // pred_check
      _
    $region7: #{tpu_custom_call.1} parent=1 // pred_check_branch
      %15 = sbr.rel (0) target = $region9
    $region8: #{tpu_custom_call.1} parent=1 // pred_region
      _
    $region9: #{tpu_custom_call.1} parent=1 // pred_fallthru
      _
    // Predicated region
    $region10: #{tpu_custom_call.1} parent=1 // pred_check
      _
    $region11: #{tpu_custom_call.1} parent=1 // pred_check_branch
      %17 = sbr.rel (0) target = $region13
    $region12: #{tpu_custom_call.1} parent=1 // pred_region
      _
    $region13: #{tpu_custom_call.1} parent=1 // pred_fallthru
      _
    // Predicated region
    $region14: #{tpu_custom_call.1} parent=1 // pred_check
      _
    $region15: #{tpu_custom_call.1} parent=1 // pred_check_branch
      %19 = sbr.rel (0) target = $region17
    $region16: #{tpu_custom_call.1} parent=1 // pred_region
      _
    $region17: #{tpu_custom_call.1} parent=1 // pred_fallthru
      _
    // Predicated region
    $region18: #{tpu_custom_call.1} parent=1 // pred_check
      _
    $region19: #{tpu_custom_call.1} parent=1 // pred_check_branch
      %21 = sbr.rel (0) target = $region21
    $region20: #{tpu_custom_call.1} parent=1 // pred_region
      _
    $region21: #{tpu_custom_call.1} parent=1 // pred_fallthru
      _
    %v22 = vld [vmem:[%s0] sm:$0xff]
    %v23 = vld [vmem:[%s0 + $0x8] sm:$0xff]
    %v24 = vld [vmem:[%s0 + $0x10] sm:$0xff]
    %v25 = vld [vmem:[%s0 + $0x18] sm:$0xff]
    %v26 = vld [vmem:[%s0 + $0x20] sm:$0xff]
    %v27 = vld [vmem:[%s0 + $0x28] sm:$0xff]
    %v28 = vld [vmem:[%s0 + $0x30] sm:$0xff]
    %v29 = vld [vmem:[%s0 + $0x38] sm:$0xff]
    %v30 = vld [vmem:[%s0 + $0x40] sm:$0xff]
    %v31 = vld [vmem:[%s0 + $0x48] sm:$0xff]
    %v32 = vld [vmem:[%s0 + $0x50] sm:$0xff]
    %v33 = vld [vmem:[%s0 + $0x58] sm:$0xff]
    %v34 = vld [vmem:[%s0 + $0x60] sm:$0xff]
    %v35 = vld [vmem:[%s0 + $0x68] sm:$0xff]
    %v36 = vld [vmem:[%s0 + $0x70] sm:$0xff]
    %v37 = vld [vmem:[%s0 + $0x78] sm:$0xff]
    %v38 = vld [vmem:[%s1] sm:$0xff]
    %v39 = vld [vmem:[%s1 + $0x8] sm:$0xff]
    %v40 = vld [vmem:[%s2] sm:$0x1]
    %v42 = vlaneseq
    %v43 = vshrl.u32 %v42, 7
    %v44 = vsub.s32 0, %v43
    %v45 = vrot.slane %v40, %v44
    %vm47 = vcmask 130048
    %v49 = vsel %vm47, %v22, 0
    %v52 = vsel %vm47, %v23, 0
    %v55 = vsel %vm47, %v24, 0
    %v58 = vsel %vm47, %v25, 0
    %v61 = vsel %vm47, %v26, 0
    %v64 = vsel %vm47, %v27, 0
    %v67 = vsel %vm47, %v28, 0
    %v70 = vsel %vm47, %v29, 0
    %v73 = vsel %vm47, %v30, 0
    %v76 = vsel %vm47, %v31, 0
    %v79 = vsel %vm47, %v32, 0
    %v82 = vsel %vm47, %v33, 0
    %v85 = vsel %vm47, %v34, 0
    %v88 = vsel %vm47, %v35, 0
    %v91 = vsel %vm47, %v36, 0
    %v94 = vsel %vm47, %v37, 0
    %96 = vmatprep.subr.mxu0 0.0
    %97 = vmatpush1.msra.mxu0 %v38
    %98 = vmatprep.subr.mxu0 0.0
    %99 = vmatpush1.msra.mxu0 %v39
    %100 = vmatprep.subr.mxu0 0.0
    %101 = vmatpush1.msra.mxu0 0.0
    %102 = vmatprep.subr.mxu0 0.0
    %103 = vmatpush1.msra.mxu0 0.0
    %104 = vmatprep.subr.mxu0 0.0
    %105 = vmatpush1.msra.mxu0 0.0
    %106 = vmatprep.subr.mxu0 0.0
    %107 = vmatpush1.msra.mxu0 0.0
    %108 = vmatprep.subr.mxu0 0.0
    %109 = vmatpush1.msra.mxu0 0.0
    %110 = vmatprep.subr.mxu0 0.0
    %111 = vmatpush1.msra.mxu0 0.0
    %112 = vmatprep.subr.mxu0 0.0
    %113 = vmatpush1.msra.mxu0 0.0
    %114 = vmatprep.subr.mxu0 0.0
    %115 = vmatpush1.msra.mxu0 0.0
    %116 = vmatprep.subr.mxu0 0.0
    %117 = vmatpush1.msra.mxu0 0.0
    %118 = vmatprep.subr.mxu0 0.0
    %119 = vmatpush1.msra.mxu0 0.0
    %120 = vmatprep.subr.mxu0 0.0
    %121 = vmatpush1.msra.mxu0 0.0
    %122 = vmatprep.subr.mxu0 0.0
    %123 = vmatpush1.msra.mxu0 0.0
    %124 = vmatprep.subr.mxu0 0.0
    %125 = vmatpush1.msra.mxu0 0.0
    %126 = vmatprep.subr.mxu0 0.0
    %127 = vmatpush1.msra.mxu0 0.0
    %128 = vmatprep.subr.mxu0 0.0
    %129 = vmatpush1.msra.mxu0 0.0
    %130 = vmatprep.subr.mxu0 0.0
    %131 = vmatpush1.msra.mxu0 0.0
    %132 = vmatprep.subr.mxu0 0.0
    %133 = vmatpush1.msra.mxu0 0.0
    %134 = vmatprep.subr.mxu0 0.0
    %135 = vmatpush1.msra.mxu0 0.0
    %136 = vmatprep.subr.mxu0 0.0
    %137 = vmatpush1.msra.mxu0 0.0
    %138 = vmatprep.subr.mxu0 0.0
    %139 = vmatpush1.msra.mxu0 0.0
    %140 = vmatprep.subr.mxu0 0.0
    %141 = vmatpush1.msra.mxu0 0.0
    %142 = vmatprep.subr.mxu0 0.0
    %143 = vmatpush1.msra.mxu0 0.0
    %144 = vmatprep.subr.mxu0 0.0
    %145 = vmatpush1.msra.mxu0 0.0
    %146 = vmatprep.subr.mxu0 0.0
    %147 = vmatpush1.msra.mxu0 0.0
    %148 = vmatprep.subr.mxu0 0.0
    %149 = vmatpush1.msra.mxu0 0.0
    %150 = vmatprep.subr.mxu0 0.0
    %151 = vmatpush1.msra.mxu0 0.0
    %152 = vmatprep.subr.mxu0 0.0
    %153 = vmatpush1.msra.mxu0 0.0
    %154 = vmatprep.subr.mxu0 0.0
    %155 = vmatpush1.msra.mxu0 0.0
    %156 = vmatprep.subr.mxu0 0.0
    %157 = vmatpush1.msra.mxu0 0.0
    %158 = vmatprep.subr.mxu0 0.0
    %159 = vmatpush1.msra.mxu0 0.0
    %160 = vmatprep.mubr.f32.mxu0 0.0
    %161 = vmatmul.mubr.f32.gmra.mrb[0].mxu0 %v49
    %v162 = vpop.f32.mrb[0].mxu0
    %v163 = vadd.f32 %v45, %v162
    %v164 = vpop.f32.mrb[0].mxu0
    %165 = vmatprep.mubr.f32.mxu0 0.0
    %166 = vmatmul.mubr.f32.gmra.mrb[0].mxu0 %v52
    %v167 = vpop.f32.mrb[0].mxu0
    %v168 = vadd.f32 %v45, %v167
    %v169 = vpop.f32.mrb[0].mxu0
    %170 = vmatprep.mubr.f32.mxu0 0.0
    %171 = vmatmul.mubr.f32.gmra.mrb[0].mxu0 %v55
    %v172 = vpop.f32.mrb[0].mxu0
    %v173 = vadd.f32 %v45, %v172
    %v174 = vpop.f32.mrb[0].mxu0
    %175 = vmatprep.mubr.f32.mxu0 0.0
    %176 = vmatmul.mubr.f32.gmra.mrb[0].mxu0 %v58
    %v177 = vpop.f32.mrb[0].mxu0
    %v178 = vadd.f32 %v45, %v177
    %v179 = vpop.f32.mrb[0].mxu0
    %180 = vmatprep.mubr.f32.mxu0 0.0
    %181 = vmatmul.mubr.f32.gmra.mrb[0].mxu0 %v61
    %v182 = vpop.f32.mrb[0].mxu0
    %v183 = vadd.f32 %v45, %v182
    %v184 = vpop.f32.mrb[0].mxu0
    %185 = vmatprep.mubr.f32.mxu0 0.0
    %186 = vmatmul.mubr.f32.gmra.mrb[0].mxu0 %v64
    %v187 = vpop.f32.mrb[0].mxu0
    %v188 = vadd.f32 %v45, %v187
    %v189 = vpop.f32.mrb[0].mxu0
    %190 = vmatprep.mubr.f32.mxu0 0.0
    %191 = vmatmul.mubr.f32.gmra.mrb[0].mxu0 %v67
    %v192 = vpop.f32.mrb[0].mxu0
    %v193 = vadd.f32 %v45, %v192
    %v194 = vpop.f32.mrb[0].mxu0
    %195 = vmatprep.mubr.f32.mxu0 0.0
    %196 = vmatmul.mubr.f32.gmra.mrb[0].mxu0 %v70
    %v197 = vpop.f32.mrb[0].mxu0
    %v198 = vadd.f32 %v45, %v197
    %v199 = vpop.f32.mrb[0].mxu0
    %200 = vmatprep.mubr.f32.mxu0 0.0
    %201 = vmatmul.mubr.f32.gmra.mrb[0].mxu0 %v73
    %v202 = vpop.f32.mrb[0].mxu0
    %v203 = vadd.f32 %v45, %v202
    %v204 = vpop.f32.mrb[0].mxu0
    %205 = vmatprep.mubr.f32.mxu0 0.0
    %206 = vmatmul.mubr.f32.gmra.mrb[0].mxu0 %v76
    %v207 = vpop.f32.mrb[0].mxu0
    %v208 = vadd.f32 %v45, %v207
    %v209 = vpop.f32.mrb[0].mxu0
    %210 = vmatprep.mubr.f32.mxu0 0.0
    %211 = vmatmul.mubr.f32.gmra.mrb[0].mxu0 %v79
    %v212 = vpop.f32.mrb[0].mxu0
    %v213 = vadd.f32 %v45, %v212
    %v214 = vpop.f32.mrb[0].mxu0
    %215 = vmatprep.mubr.f32.mxu0 0.0
    %216 = vmatmul.mubr.f32.gmra.mrb[0].mxu0 %v82
    %v217 = vpop.f32.mrb[0].mxu0
    %v218 = vadd.f32 %v45, %v217
    %v219 = vpop.f32.mrb[0].mxu0
    %220 = vmatprep.mubr.f32.mxu0 0.0
    %221 = vmatmul.mubr.f32.gmra.mrb[0].mxu0 %v85
    %v222 = vpop.f32.mrb[0].mxu0
    %v223 = vadd.f32 %v45, %v222
    %v224 = vpop.f32.mrb[0].mxu0
    %225 = vmatprep.mubr.f32.mxu0 0.0
    %226 = vmatmul.mubr.f32.gmra.mrb[0].mxu0 %v88
    %v227 = vpop.f32.mrb[0].mxu0
    %v228 = vadd.f32 %v45, %v227
    %v229 = vpop.f32.mrb[0].mxu0
    %230 = vmatprep.mubr.f32.mxu0 0.0
    %231 = vmatmul.mubr.f32.gmra.mrb[0].mxu0 %v91
    %v232 = vpop.f32.mrb[0].mxu0
    %v233 = vadd.f32 %v45, %v232
    %v234 = vpop.f32.mrb[0].mxu0
    %235 = vmatprep.mubr.f32.mxu0 0.0
    %236 = vmatmul.mubr.f32.gmra.mrb[0].mxu0 %v94
    %v237 = vpop.f32.mrb[0].mxu0
    %v238 = vadd.f32 %v45, %v237
    %v239 = vpop.f32.mrb[0].mxu0
    %240 = vdwg.mxu0
    %v241 = vmax.f32 %v163, 0.0
    %v242 = vmax.f32 %v168, 0.0
    %v243 = vmax.f32 %v173, 0.0
    %v244 = vmax.f32 %v178, 0.0
    %v245 = vmax.f32 %v183, 0.0
    %v246 = vmax.f32 %v188, 0.0
    %v247 = vmax.f32 %v193, 0.0
    %v248 = vmax.f32 %v198, 0.0
    %v249 = vmax.f32 %v203, 0.0
    %v250 = vmax.f32 %v208, 0.0
    %v251 = vmax.f32 %v213, 0.0
    %v252 = vmax.f32 %v218, 0.0
    %v253 = vmax.f32 %v223, 0.0
    %v254 = vmax.f32 %v228, 0.0
    %v255 = vmax.f32 %v233, 0.0
    %v256 = vmax.f32 %v238, 0.0
    %v257 = vld [vmem:[%s3] sm:$0x1]
    %s258 = sld [smem:[#allocation2]]
    %v259 = vstv %s258
    %vm260 = vcmask 261120
    %v262 = vsel %vm260, %v257, 0
    %v265 = vsel %vm260, %v241, 0
    %v268 = vsel %vm260, %v242, 0
    %v271 = vsel %vm260, %v243, 0
    %v274 = vsel %vm260, %v244, 0
    %v277 = vsel %vm260, %v245, 0
    %v280 = vsel %vm260, %v246, 0
    %v283 = vsel %vm260, %v247, 0
    %v286 = vsel %vm260, %v248, 0
    %v289 = vsel %vm260, %v249, 0
    %v292 = vsel %vm260, %v250, 0
    %v295 = vsel %vm260, %v251, 0
    %v298 = vsel %vm260, %v252, 0
    %v301 = vsel %vm260, %v253, 0
    %v304 = vsel %vm260, %v254, 0
    %v307 = vsel %vm260, %v255, 0
    %v310 = vsel %vm260, %v256, 0
    %312 = vmatprep.subr.mxu0 0.0
    %313 = vmatpush1.xpose.msra.mxu0 %v265
    %314 = vmatprep.subr.mxu0 0.0
    %315 = vmatpush1.xpose.msra.mxu0 %v268
    %316 = vmatprep.subr.mxu0 0.0
    %317 = vmatpush1.xpose.msra.mxu0 %v271
    %318 = vmatprep.subr.mxu0 0.0
    %319 = vmatpush1.xpose.msra.mxu0 %v274
    %320 = vmatprep.subr.mxu0 0.0
    %321 = vmatpush1.xpose.msra.mxu0 %v277
    %322 = vmatprep.subr.mxu0 0.0
    %323 = vmatpush1.xpose.msra.mxu0 %v280
    %324 = vmatprep.subr.mxu0 0.0
    %325 = vmatpush1.xpose.msra.mxu0 %v283
    %326 = vmatprep.subr.mxu0 0.0
    %327 = vmatpush1.xpose.msra.mxu0 %v286
    %328 = vmatprep.subr.mxu0 0.0
    %329 = vmatpush1.xpose.msra.mxu0 %v289
    %330 = vmatprep.subr.mxu0 0.0
    %331 = vmatpush1.xpose.msra.mxu0 %v292
    %332 = vmatprep.subr.mxu0 0.0
    %333 = vmatpush1.xpose.msra.mxu0 %v295
    %334 = vmatprep.subr.mxu0 0.0
    %335 = vmatpush1.xpose.msra.mxu0 %v298
    %336 = vmatprep.subr.mxu0 0.0
    %337 = vmatpush1.xpose.msra.mxu0 %v301
    %338 = vmatprep.subr.mxu0 0.0
    %339 = vmatpush1.xpose.msra.mxu0 %v304
    %340 = vmatprep.subr.mxu0 0.0
    %341 = vmatpush1.xpose.msra.mxu0 %v307
    %342 = vmatprep.subr.mxu0 0.0
    %343 = vmatpush1.xpose.msra.mxu0 %v310
    %344 = vmatprep.subr.mxu0 0.0
    %345 = vmatpush1.xpose.msra.mxu0 0.0
    %346 = vmatprep.subr.mxu0 0.0
    %347 = vmatpush1.xpose.msra.mxu0 0.0
    %348 = vmatprep.subr.mxu0 0.0
    %349 = vmatpush1.xpose.msra.mxu0 0.0
    %350 = vmatprep.subr.mxu0 0.0
    %351 = vmatpush1.xpose.msra.mxu0 0.0
    %352 = vmatprep.subr.mxu0 0.0
    %353 = vmatpush1.xpose.msra.mxu0 0.0
    %354 = vmatprep.subr.mxu0 0.0
    %355 = vmatpush1.xpose.msra.mxu0 0.0
    %356 = vmatprep.subr.mxu0 0.0
    %357 = vmatpush1.xpose.msra.mxu0 0.0
    %358 = vmatprep.subr.mxu0 0.0
    %359 = vmatpush1.xpose.msra.mxu0 0.0
    %360 = vmatprep.subr.mxu0 0.0
    %361 = vmatpush1.xpose.msra.mxu0 0.0
    %362 = vmatprep.subr.mxu0 0.0
    %363 = vmatpush1.xpose.msra.mxu0 0.0
    %364 = vmatprep.subr.mxu0 0.0
    %365 = vmatpush1.xpose.msra.mxu0 0.0
    %366 = vmatprep.subr.mxu0 0.0
    %367 = vmatpush1.xpose.msra.mxu0 0.0
    %368 = vmatprep.subr.mxu0 0.0
    %369 = vmatpush1.xpose.msra.mxu0 0.0
    %370 = vmatprep.subr.mxu0 0.0
    %371 = vmatpush1.xpose.msra.mxu0 0.0
    %372 = vmatprep.subr.mxu0 0.0
    %373 = vmatpush1.xpose.msra.mxu0 0.0
    %374 = vmatprep.subr.mxu0 0.0
    %375 = vmatpush1.xpose.msra.mxu0 0.0
    %376 = vmatprep.mubr.f32.mxu0 0.0
    %377 = vmatmul.mubr.f32.gmra.mrb[0].mxu0 %v262
    %v378 = vpop.f32.mrb[0].mxu0
    %v379 = vadd.f32 %v259, %v378
    %v380 = vpop.f32.mrb[0].mxu0
    %381 = vdwg.mxu0
    %382 = vst [vmem:[#allocation3] sm:$0x1] %v379
    // Predicated region
    $region22: #{tpu_custom_call.1} parent=1 // pred_check
      _
    $region23: #{tpu_custom_call.1} parent=1 // pred_check_branch
      %384 = sbr.rel (0) target = $region25
    $region24: #{tpu_custom_call.1} parent=1 // pred_region
      %s386 = ssub.s32 16, 16
      %387 = vsyncadd [#allocation4], %s386
      %s389 = sshll.u32 [#allocation3], 4
      %s390 = int_to_ptr.vmem [resolvable:$true] %s389
      %392 = dma.vmem_to_hbm [thread:$0]  %s390, 16, %s5, [#allocation4]
    $region25: #{tpu_custom_call.1} parent=1 // pred_fallthru
      _
    // Predicated region
    $region26: #{tpu_custom_call.1} parent=1 // pred_check
      _
    $region27: #{tpu_custom_call.1} parent=1 // pred_check_branch
      %394 = sbr.rel (0) target = $region29
    $region28: #{tpu_custom_call.1} parent=1 // pred_region
      %395 = dma.done [#allocation4], 16
    $region29: #{tpu_custom_call.1} parent=1 // pred_fallthru
      _
    %396 = vsyncpa [#allocation4], 1

</llo_original>
